<compile_context>
chip_gen: v7x
topology: tpu7x:2x2x1
jax: 0.10.0
libtpu: 0.0.40
codegen_flags: <defaults>
</compile_context>

<pallas_src>
import functools

import jax
import jax.numpy as jnp
from jax import lax
from jax.experimental import pallas as pl
from jax.experimental.pallas import tpu as pltpu

_LANE = 128


def _round_up(n, m):
    return -(-n // m) * m


def _mlp_kernel(x_ref, w1_ref, b1_ref, w2_ref, b2_ref, w3_ref, b3_ref, o_ref):
    # x_ref: (bt, I) natural layout; all math keeps batch on the LANE axis.
    wdt = w1_ref.dtype
    x = x_ref[...].astype(wdt)                                    # (bt, I)

    # h1 = W1 @ x^T  -> (H, bt): contract the feature axis of both operands.
    h1 = lax.dot_general(
        w1_ref[...], x, (((1,), (1,)), ((), ())),
        preferred_element_type=jnp.float32) + b1_ref[...]
    h1 = jnp.maximum(h1, 0.0)

    h2 = jnp.dot(w2_ref[...], h1.astype(wdt),
                 preferred_element_type=jnp.float32) + b2_ref[...]
    h2 = jnp.maximum(h2, 0.0)

    h3 = jnp.dot(w3_ref[...], h2.astype(wdt),
                 preferred_element_type=jnp.float32) + b3_ref[...]
    o_ref[...] = jnp.tanh(h3).astype(o_ref.dtype)


@functools.partial(jax.jit, static_argnames=("batch_tile",))
def smart_particle_controller(x, params, batch_tile=4096):
    """Forward pass of SmartParticleController.

    x:      (B, input_size) float32
    params: dict with PyTorch-layout tensors:
            w1 (H, I), b1 (H, 1), w2 (H, H), b2 (H, 1), w3 (O, H), b3 (O, 1)
            (weights may be f32 or bf16; biases f32)
    Returns (B, output_size) float32.
    """
    w1, b1 = params["w1"], params["b1"]
    w2, b2 = params["w2"], params["b2"]
    w3, b3 = params["w3"], params["b3"]

    B, I = x.shape
    H = w1.shape[0]
    O = w3.shape[0]

    # --- Tile / padding selection -----------------------------------------
    # Pad the batch only to the 128-lane granule.
    B_pad128 = _round_up(B, _LANE)

    bt = max(_LANE, (batch_tile // _LANE) * _LANE)
    bt = min(bt, B_pad128)
    # v7x megacore: guarantee >=2 grid steps once there are >=256 padded rows
    # so the "parallel" batch axis shards across both TensorCores.
    if B_pad128 >= 2 * _LANE:
        bt = min(bt, _round_up(pl.cdiv(B_pad128, 2), _LANE))
    # Re-balance tiles across steps: bounds padding waste to <128 rows/step.
    n_steps = pl.cdiv(B_pad128, bt)
    bt = _round_up(pl.cdiv(B_pad128, n_steps), _LANE)
    B_pad = n_steps * bt

    # Zero-pad the batch rows (no transpose: x stays (B, I) in HBM).
    x_pad = jnp.pad(x, ((0, B_pad - B), (0, 0)))

    grid = (n_steps,)

    # Weights/biases are tiny: full tensors with a constant index_map, so
    # Pallas does not re-DMA them when the block index is unchanged.
    full = lambda shape: pl.BlockSpec(shape, lambda i: (0, 0))

    flops = 2 * B_pad * (I * H + H * H + H * O)
    bytes_accessed = 4 * (I * B_pad + O * B_pad) + (
        w1.dtype.itemsize * (I * H + H * H + H * O) + 4 * (2 * H + O))
    cost = pl.CostEstimate(
        flops=int(flops),
        transcendentals=int(B_pad * O),
        bytes_accessed=int(bytes_accessed),
    )

    # Per-step VMEM estimate: double-buffered x/out tiles + weights, plus f32
    # intermediates.  Only set an explicit limit when it gets large (v5e's
    # scoped default is 16 MiB).
    vmem_est = 4 * (2 * bt * (I + O) + 3 * bt * H) + \
        2 * w1.dtype.itemsize * (I * H + H * H + H * O) + 4 * 2 * (2 * H + O)
    vmem_limit = None
    if vmem_est > 12 * 1024 * 1024:
        vmem_limit = int(min(2 * vmem_est, 112 * 1024 * 1024))

    out_t = pl.pallas_call(
        _mlp_kernel,
        out_shape=jax.ShapeDtypeStruct((O, B_pad), x.dtype),
        grid_spec=pltpu.PrefetchScalarGridSpec(
            num_scalar_prefetch=0,
            grid=grid,
            in_specs=[
                pl.BlockSpec((bt, I), lambda i: (i, 0)),   # x tile, natural layout
                full((H, I)),
                full((H, 1)),
                full((H, H)),
                full((H, 1)),
                full((O, H)),
                full((O, 1)),
            ],
            out_specs=pl.BlockSpec((O, bt), lambda i: (0, i)),  # lane-dense store
        ),
        compiler_params=pltpu.CompilerParams(
            dimension_semantics=("parallel",),
            vmem_limit_bytes=vmem_limit,
        ),
        cost_estimate=cost,
    )(x_pad, w1, b1, w2, b2, w3, b3)

    # Output transpose is the cheap one (O * B floats); padded rows sliced off.
    return out_t.T[:B]


def init_params(key, input_size, hidden_size, output_size, weights_dtype=jnp.float32):
    """Deterministic init mimicking nn.Linear's uniform(-1/sqrt(fan_in), +).

    Weights in PyTorch (out_features, in_features) layout; biases (out, 1).
    """
    ks = jax.random.split(key, 6)

    def lin(kw, kb, fan_in, fan_out):
        bound = 1.0 / jnp.sqrt(fan_in)
        w = jax.random.uniform(kw, (fan_out, fan_in), jnp.float32, -bound, bound)
        b = jax.random.uniform(kb, (fan_out, 1), jnp.float32, -bound, bound)
        return w.astype(weights_dtype), b

    w1, b1 = lin(ks[0], ks[1], input_size, hidden_size)
    w2, b2 = lin(ks[2], ks[3], hidden_size, hidden_size)
    w3, b3 = lin(ks[4], ks[5], hidden_size, output_size)
    return {"w1": w1, "b1": b1, "w2": w2, "b2": b2, "w3": w3, "b3": b3}


def _reference(x, p):
    w1 = p["w1"].astype(jnp.float32)
    w2 = p["w2"].astype(jnp.float32)
    w3 = p["w3"].astype(jnp.float32)
    h1 = jnp.maximum(x @ w1.T + p["b1"].T, 0.0)
    h2 = jnp.maximum(h1 @ w2.T + p["b2"].T, 0.0)
    return jnp.tanh(h2 @ w3.T + p["b3"].T)


if __name__ == "__main__":
    input_size, hidden_size, output_size = 8, 32, 4
    key = jax.random.PRNGKey(0)
    kx, kx2, kp = jax.random.split(key, 3)
    params = init_params(kp, input_size, hidden_size, output_size)

    # 1) Small batch (not a multiple of 128) -> single grid step, padding path.
    batch = 16
    x = jax.random.normal(kx, (batch, input_size), jnp.float32)
    out = jax.block_until_ready(smart_particle_controller(x, params))
    ref = _reference(x, params)
    assert out.shape == (batch, output_size)
    assert jnp.allclose(out, ref, atol=1e-5, rtol=1e-5)

    # 2) Larger odd batch with a small tile -> multi-step grid (exercises the
    #    tile re-balancing and the >=2-step megacore clamp).
    batch2 = 300
    x2 = jax.random.normal(kx2, (batch2, input_size), jnp.float32)
    out2 = jax.block_until_ready(
        smart_particle_controller(x2, params, batch_tile=256))
    ref2 = _reference(x2, params)
    assert out2.shape == (batch2, output_size)
    assert jnp.allclose(out2, ref2, atol=1e-5, rtol=1e-5)

    # 3) Optional bf16 weights path (f32 accumulation in-kernel).
    params_bf16 = {k: (v.astype(jnp.bfloat16) if k.startswith("w") else v)
                   for k, v in params.items()}
    out3 = jax.block_until_ready(smart_particle_controller(x2, params_bf16))
    assert out3.shape == (batch2, output_size)
    assert jnp.allclose(out3, ref2, atol=5e-2, rtol=5e-2)

    print("KERNEL_OK")
</pallas_src>

<mosaic_0001>
module attributes {stable_mosaic.version = 11 : i64} {
  func.func @_mlp_kernel(%arg0: i32, %arg1: memref<128x8xf32, #tpu.memory_space<vmem>>, %arg2: memref<32x8xf32, #tpu.memory_space<vmem>>, %arg3: memref<32x1xf32, #tpu.memory_space<vmem>>, %arg4: memref<32x32xf32, #tpu.memory_space<vmem>>, %arg5: memref<32x1xf32, #tpu.memory_space<vmem>>, %arg6: memref<4x32xf32, #tpu.memory_space<vmem>>, %arg7: memref<4x1xf32, #tpu.memory_space<vmem>>, %arg8: memref<4x128xf32, #tpu.memory_space<vmem>>) attributes {dimension_semantics = [#tpu.dimension_semantics<parallel>], iteration_bounds = array<i64: 1>, scalar_prefetch = 0 : i64, scratch_operands = 0 : i64, tpu.core_type = #tpu.core_type<tc>, window_params = [{transform_indices = @transform_0, window_bounds = array<i64: 128, 8>}, {pipeline_mode = #tpu.pipeline_mode<synchronous>, transform_indices = @transform_1, window_bounds = array<i64: 32, 8>}, {pipeline_mode = #tpu.pipeline_mode<synchronous>, transform_indices = @transform_2, window_bounds = array<i64: 32, 1>}, {pipeline_mode = #tpu.pipeline_mode<synchronous>, transform_indices = @transform_3, window_bounds = array<i64: 32, 32>}, {pipeline_mode = #tpu.pipeline_mode<synchronous>, transform_indices = @transform_4, window_bounds = array<i64: 32, 1>}, {pipeline_mode = #tpu.pipeline_mode<synchronous>, transform_indices = @transform_5, window_bounds = array<i64: 4, 32>}, {pipeline_mode = #tpu.pipeline_mode<synchronous>, transform_indices = @transform_6, window_bounds = array<i64: 4, 1>}, {transform_indices = @transform_7, window_bounds = array<i64: 4, 128>}]} {
    %c0 = arith.constant 0 : index
    %c0_0 = arith.constant 0 : index
    %0 = vector.load %arg1[%c0, %c0_0] : memref<128x8xf32, #tpu.memory_space<vmem>>, vector<128x8xf32>
    %c0_1 = arith.constant 0 : index
    %c0_2 = arith.constant 0 : index
    %1 = vector.load %arg2[%c0_1, %c0_2] : memref<32x8xf32, #tpu.memory_space<vmem>>, vector<32x8xf32>
    %cst = arith.constant dense<0.000000e+00> : vector<32x128xf32>
    %2 = tpu.matmul %1, %0, %cst {dimension_numbers = #tpu.dot_dimension_numbers<[1], [1], [0], [0], [0, 0, 1, 0], [], []>} : vector<32x8xf32>, vector<128x8xf32>, vector<32x128xf32> -> vector<32x128xf32>
    %c0_3 = arith.constant 0 : index
    %c0_4 = arith.constant 0 : index
    %3 = vector.load %arg3[%c0_3, %c0_4] : memref<32x1xf32, #tpu.memory_space<vmem>>, vector<32x1xf32>
    %4 = vector.broadcast %3 : vector<32x1xf32> to vector<32x128xf32>
    %5 = arith.addf %2, %4 : vector<32x128xf32>
    %cst_5 = arith.constant 0.000000e+00 : f32
    %6 = vector.broadcast %cst_5 : f32 to vector<32x128xf32>
    %7 = arith.maximumf %5, %6 : vector<32x128xf32>
    %c0_6 = arith.constant 0 : index
    %c0_7 = arith.constant 0 : index
    %8 = vector.load %arg4[%c0_6, %c0_7] : memref<32x32xf32, #tpu.memory_space<vmem>>, vector<32x32xf32>
    %cst_8 = arith.constant dense<0.000000e+00> : vector<32x128xf32>
    %9 = tpu.matmul %8, %7, %cst_8 {dimension_numbers = #tpu.dot_dimension_numbers<[1], [0], [0], [1], [0, 0, 1, 1], [], []>} : vector<32x32xf32>, vector<32x128xf32>, vector<32x128xf32> -> vector<32x128xf32>
    %c0_9 = arith.constant 0 : index
    %c0_10 = arith.constant 0 : index
    %10 = vector.load %arg5[%c0_9, %c0_10] : memref<32x1xf32, #tpu.memory_space<vmem>>, vector<32x1xf32>
    %11 = vector.broadcast %10 : vector<32x1xf32> to vector<32x128xf32>
    %12 = arith.addf %9, %11 : vector<32x128xf32>
    %cst_11 = arith.constant 0.000000e+00 : f32
    %13 = vector.broadcast %cst_11 : f32 to vector<32x128xf32>
    %14 = arith.maximumf %12, %13 : vector<32x128xf32>
    %c0_12 = arith.constant 0 : index
    %c0_13 = arith.constant 0 : index
    %15 = vector.load %arg6[%c0_12, %c0_13] : memref<4x32xf32, #tpu.memory_space<vmem>>, vector<4x32xf32>
    %cst_14 = arith.constant dense<0.000000e+00> : vector<4x128xf32>
    %16 = tpu.matmul %15, %14, %cst_14 {dimension_numbers = #tpu.dot_dimension_numbers<[1], [0], [0], [1], [0, 0, 1, 1], [], []>} : vector<4x32xf32>, vector<32x128xf32>, vector<4x128xf32> -> vector<4x128xf32>
    %c0_15 = arith.constant 0 : index
    %c0_16 = arith.constant 0 : index
    %17 = vector.load %arg7[%c0_15, %c0_16] : memref<4x1xf32, #tpu.memory_space<vmem>>, vector<4x1xf32>
    %18 = vector.broadcast %17 : vector<4x1xf32> to vector<4x128xf32>
    %19 = arith.addf %16, %18 : vector<4x128xf32>
    %20 = math.tanh %19 : vector<4x128xf32>
    %c0_17 = arith.constant 0 : index
    %c0_18 = arith.constant 0 : index
    %21 = vector.load %arg8[%c0_17, %c0_18] : memref<4x128xf32, #tpu.memory_space<vmem>>, vector<4x128xf32>
    tpu.vector_store %arg8[%c0_17, %c0_18], %20 {strides = array<i32>} : memref<4x128xf32, #tpu.memory_space<vmem>>, vector<4x128xf32>,
    return
  }
  func.func @transform_0(%arg0: i32) -> (i32, i32) {
    %c0_i32 = arith.constant 0 : i32
    %c0_i32_0 = arith.constant 0 : i32
    return %arg0, %c0_i32 : i32, i32
  }
  func.func @transform_1(%arg0: i32) -> (i32, i32) {
    %c0_i32 = arith.constant 0 : i32
    %c0_i32_0 = arith.constant 0 : i32
    %c0_i32_1 = arith.constant 0 : i32
    return %c0_i32, %c0_i32_0 : i32, i32
  }
  func.func @transform_2(%arg0: i32) -> (i32, i32) {
    %c0_i32 = arith.constant 0 : i32
    %c0_i32_0 = arith.constant 0 : i32
    %c0_i32_1 = arith.constant 0 : i32
    return %c0_i32, %c0_i32_0 : i32, i32
  }
  func.func @transform_3(%arg0: i32) -> (i32, i32) {
    %c0_i32 = arith.constant 0 : i32
    %c0_i32_0 = arith.constant 0 : i32
    %c0_i32_1 = arith.constant 0 : i32
    return %c0_i32, %c0_i32_0 : i32, i32
  }
  func.func @transform_4(%arg0: i32) -> (i32, i32) {
    %c0_i32 = arith.constant 0 : i32
    %c0_i32_0 = arith.constant 0 : i32
    %c0_i32_1 = arith.constant 0 : i32
    return %c0_i32, %c0_i32_0 : i32, i32
  }
  func.func @transform_5(%arg0: i32) -> (i32, i32) {
    %c0_i32 = arith.constant 0 : i32
    %c0_i32_0 = arith.constant 0 : i32
    %c0_i32_1 = arith.constant 0 : i32
    return %c0_i32, %c0_i32_0 : i32, i32
  }
  func.func @transform_6(%arg0: i32) -> (i32, i32) {
    %c0_i32 = arith.constant 0 : i32
    %c0_i32_0 = arith.constant 0 : i32
    %c0_i32_1 = arith.constant 0 : i32
    return %c0_i32, %c0_i32_0 : i32, i32
  }
  func.func @transform_7(%arg0: i32) -> (i32, i32) {
    %c0_i32 = arith.constant 0 : i32
    %c0_i32_0 = arith.constant 0 : i32
    return %c0_i32, %arg0 : i32, i32
  }
}

</mosaic_0001>

<llo_original>
// kernel: smart_particle_controller.1
$region0: #{smart_particle_controller.1}
  #allocation0 [shape = 'u32[]', space=smem, size = 0x4, offset = 0x4, fixed_abs, tag = 'smem constant byte address 0x4 - core index']
  #allocation1 [shape = 'u32[144,128]{1,0:T(1,128)}', space=vmem, size = 0x12000, scoped, tag = 'internal scratch']
  %s0 = inlined_call_operand.vmem [shape: f32[128,8], index: 0, kind: input, shape index: {}]
  %s1 = inlined_call_operand.vmem [shape: f32[32,8], index: 1, kind: input, shape index: {}]
  %s2 = inlined_call_operand.vmem [shape: f32[32,1], index: 2, kind: input, shape index: {}]
  %s3 = inlined_call_operand.vmem [shape: f32[32,32], index: 3, kind: input, shape index: {}]
  %s4 = inlined_call_operand.vmem [shape: f32[32,1], index: 4, kind: input, shape index: {}]
  %s5 = inlined_call_operand.vmem [shape: f32[4,32], index: 5, kind: input, shape index: {}]
  %s6 = inlined_call_operand.vmem [shape: f32[4,1], index: 6, kind: input, shape index: {}]
  %s7 = inlined_call_operand.hbm [shape: f32[4,128], index: 7, kind: output, shape index: {}]
  %s8 = sld [smem:[#allocation0]]
  $region38: #{smart_particle_controller.1} parent=0
    _
  %s10 = ssub.s32 1, %s8
  %s11 = scalar_select 0, %s10, %s8
  $region1: #{smart_particle_controller.1} parent=0
    #allocation2 [shape = 'u8[2048]{0}', space=vmem, size = 0x800, scoped, tag = 'output window, operand 0, single buffered']
    #allocation3 [shape = 's32[1]{0}', space=sflag, size = 0x4, scoped, tag = 'scoped memory for smart_particle_controller.1']
    %12 = vsyncpa [#allocation3], 0
    // Predicated region
    $region2: #{smart_particle_controller.1} parent=1 // pred_check
      _
    $region3: #{smart_particle_controller.1} parent=1 // pred_check_branch
      %14 = sbr.rel (0) target = $region5
    $region4: #{smart_particle_controller.1} parent=1 // pred_region
      _
    $region5: #{smart_particle_controller.1} parent=1 // pred_fallthru
      _
    // Predicated region
    $region6: #{smart_particle_controller.1} parent=1 // pred_check
      _
    $region7: #{smart_particle_controller.1} parent=1 // pred_check_branch
      %16 = sbr.rel (0) target = $region9
    $region8: #{smart_particle_controller.1} parent=1 // pred_region
      _
    $region9: #{smart_particle_controller.1} parent=1 // pred_fallthru
      _
    // Predicated region
    $region10: #{smart_particle_controller.1} parent=1 // pred_check
      _
    $region11: #{smart_particle_controller.1} parent=1 // pred_check_branch
      %18 = sbr.rel (0) target = $region13
    $region12: #{smart_particle_controller.1} parent=1 // pred_region
      _
    $region13: #{smart_particle_controller.1} parent=1 // pred_fallthru
      _
    // Predicated region
    $region14: #{smart_particle_controller.1} parent=1 // pred_check
      _
    $region15: #{smart_particle_controller.1} parent=1 // pred_check_branch
      %20 = sbr.rel (0) target = $region17
    $region16: #{smart_particle_controller.1} parent=1 // pred_region
      _
    $region17: #{smart_particle_controller.1} parent=1 // pred_fallthru
      _
    // Predicated region
    $region18: #{smart_particle_controller.1} parent=1 // pred_check
      _
    $region19: #{smart_particle_controller.1} parent=1 // pred_check_branch
      %22 = sbr.rel (0) target = $region21
    $region20: #{smart_particle_controller.1} parent=1 // pred_region
      _
    $region21: #{smart_particle_controller.1} parent=1 // pred_fallthru
      _
    // Predicated region
    $region22: #{smart_particle_controller.1} parent=1 // pred_check
      _
    $region23: #{smart_particle_controller.1} parent=1 // pred_check_branch
      %24 = sbr.rel (0) target = $region25
    $region24: #{smart_particle_controller.1} parent=1 // pred_region
      _
    $region25: #{smart_particle_controller.1} parent=1 // pred_fallthru
      _
    // Predicated region
    $region26: #{smart_particle_controller.1} parent=1 // pred_check
      _
    $region27: #{smart_particle_controller.1} parent=1 // pred_check_branch
      %26 = sbr.rel (0) target = $region29
    $region28: #{smart_particle_controller.1} parent=1 // pred_region
      _
    $region29: #{smart_particle_controller.1} parent=1 // pred_fallthru
      _
    %v27 = vld [vmem:[%s0] sm:$0xff]
    %v28 = vld [vmem:[%s0 + $0x8] sm:$0xff]
    %v29 = vld [vmem:[%s0 + $0x10] sm:$0xff]
    %v30 = vld [vmem:[%s0 + $0x18] sm:$0xff]
    %v31 = vld [vmem:[%s0 + $0x20] sm:$0xff]
    %v32 = vld [vmem:[%s0 + $0x28] sm:$0xff]
    %v33 = vld [vmem:[%s0 + $0x30] sm:$0xff]
    %v34 = vld [vmem:[%s0 + $0x38] sm:$0xff]
    %v35 = vld [vmem:[%s0 + $0x40] sm:$0xff]
    %v36 = vld [vmem:[%s0 + $0x48] sm:$0xff]
    %v37 = vld [vmem:[%s0 + $0x50] sm:$0xff]
    %v38 = vld [vmem:[%s0 + $0x58] sm:$0xff]
    %v39 = vld [vmem:[%s0 + $0x60] sm:$0xff]
    %v40 = vld [vmem:[%s0 + $0x68] sm:$0xff]
    %v41 = vld [vmem:[%s0 + $0x70] sm:$0xff]
    %v42 = vld [vmem:[%s0 + $0x78] sm:$0xff]
    %v43 = vld [vmem:[%s1] sm:$0xff]
    %v44 = vld [vmem:[%s1 + $0x8] sm:$0xff]
    %v45 = vld [vmem:[%s1 + $0x10] sm:$0xff]
    %v46 = vld [vmem:[%s1 + $0x18] sm:$0xff]
    %v47 = vld [vmem:[%s2] sm:$0xff]
    %v48 = vld [vmem:[%s2 + $0x8] sm:$0xff]
    %v49 = vld [vmem:[%s2 + $0x10] sm:$0xff]
    %v50 = vld [vmem:[%s2 + $0x18] sm:$0xff]
    %52 = vset.pattern.permute.xlu0 0
    %53 = vperm.xlu0 %52, %v47
    %v54 = vpop.permute.xlu0 %53
    %57 = vset.pattern.permute.xlu0 0
    %58 = vperm.xlu0 %57, %v48
    %v59 = vpop.permute.xlu0 %58
    %62 = vset.pattern.permute.xlu0 0
    %63 = vperm.xlu0 %62, %v49
    %v64 = vpop.permute.xlu0 %63
    %67 = vset.pattern.permute.xlu0 0
    %68 = vperm.xlu0 %67, %v50
    %v69 = vpop.permute.xlu0 %68
    %vm71 = vcmask 64512
    %v73 = vsel %vm71, %v43, 0
    %v76 = vsel %vm71, %v44, 0
    %v79 = vsel %vm71, %v45, 0
    %v82 = vsel %vm71, %v46, 0
    %v85 = vsel %vm71, %v27, 0
    %v88 = vsel %vm71, %v28, 0
    %v91 = vsel %vm71, %v29, 0
    %v94 = vsel %vm71, %v30, 0
    %v97 = vsel %vm71, %v31, 0
    %v100 = vsel %vm71, %v32, 0
    %v103 = vsel %vm71, %v33, 0
    %v106 = vsel %vm71, %v34, 0
    %v109 = vsel %vm71, %v35, 0
    %v112 = vsel %vm71, %v36, 0
    %v115 = vsel %vm71, %v37, 0
    %v118 = vsel %vm71, %v38, 0
    %v121 = vsel %vm71, %v39, 0
    %v124 = vsel %vm71, %v40, 0
    %v127 = vsel %vm71, %v41, 0
    %v130 = vsel %vm71, %v42, 0
    %132 = vmatprep.subr.mxu0 0.0
    %133 = vmatpush1.xpose.msra.mxu0 %v85
    %134 = vmatprep.subr.mxu0 0.0
    %135 = vmatpush1.xpose.msra.mxu0 %v88
    %136 = vmatprep.subr.mxu0 0.0
    %137 = vmatpush1.xpose.msra.mxu0 %v91
    %138 = vmatprep.subr.mxu0 0.0
    %139 = vmatpush1.xpose.msra.mxu0 %v94
    %140 = vmatprep.subr.mxu0 0.0
    %141 = vmatpush1.xpose.msra.mxu0 %v97
    %142 = vmatprep.subr.mxu0 0.0
    %143 = vmatpush1.xpose.msra.mxu0 %v100
    %144 = vmatprep.subr.mxu0 0.0
    %145 = vmatpush1.xpose.msra.mxu0 %v103
    %146 = vmatprep.subr.mxu0 0.0
    %147 = vmatpush1.xpose.msra.mxu0 %v106
    %148 = vmatprep.subr.mxu0 0.0
    %149 = vmatpush1.xpose.msra.mxu0 %v109
    %150 = vmatprep.subr.mxu0 0.0
    %151 = vmatpush1.xpose.msra.mxu0 %v112
    %152 = vmatprep.subr.mxu0 0.0
    %153 = vmatpush1.xpose.msra.mxu0 %v115
    %154 = vmatprep.subr.mxu0 0.0
    %155 = vmatpush1.xpose.msra.mxu0 %v118
    %156 = vmatprep.subr.mxu0 0.0
    %157 = vmatpush1.xpose.msra.mxu0 %v121
    %158 = vmatprep.subr.mxu0 0.0
    %159 = vmatpush1.xpose.msra.mxu0 %v124
    %160 = vmatprep.subr.mxu0 0.0
    %161 = vmatpush1.xpose.msra.mxu0 %v127
    %162 = vmatprep.subr.mxu0 0.0
    %163 = vmatpush1.xpose.msra.mxu0 %v130
    %164 = vmatprep.subr.mxu0 0.0
    %165 = vmatpush1.xpose.msra.mxu0 0.0
    %166 = vmatprep.subr.mxu0 0.0
    %167 = vmatpush1.xpose.msra.mxu0 0.0
    %168 = vmatprep.subr.mxu0 0.0
    %169 = vmatpush1.xpose.msra.mxu0 0.0
    %170 = vmatprep.subr.mxu0 0.0
    %171 = vmatpush1.xpose.msra.mxu0 0.0
    %172 = vmatprep.subr.mxu0 0.0
    %173 = vmatpush1.xpose.msra.mxu0 0.0
    %174 = vmatprep.subr.mxu0 0.0
    %175 = vmatpush1.xpose.msra.mxu0 0.0
    %176 = vmatprep.subr.mxu0 0.0
    %177 = vmatpush1.xpose.msra.mxu0 0.0
    %178 = vmatprep.subr.mxu0 0.0
    %179 = vmatpush1.xpose.msra.mxu0 0.0
    %180 = vmatprep.subr.mxu0 0.0
    %181 = vmatpush1.xpose.msra.mxu0 0.0
    %182 = vmatprep.subr.mxu0 0.0
    %183 = vmatpush1.xpose.msra.mxu0 0.0
    %184 = vmatprep.subr.mxu0 0.0
    %185 = vmatpush1.xpose.msra.mxu0 0.0
    %186 = vmatprep.subr.mxu0 0.0
    %187 = vmatpush1.xpose.msra.mxu0 0.0
    %188 = vmatprep.subr.mxu0 0.0
    %189 = vmatpush1.xpose.msra.mxu0 0.0
    %190 = vmatprep.subr.mxu0 0.0
    %191 = vmatpush1.xpose.msra.mxu0 0.0
    %192 = vmatprep.subr.mxu0 0.0
    %193 = vmatpush1.xpose.msra.mxu0 0.0
    %194 = vmatprep.subr.mxu0 0.0
    %195 = vmatpush1.xpose.msra.mxu0 0.0
    %196 = vmatprep.mubr.f32.mxu0 0.0
    %197 = vmatmul.mubr.f32.gmra.mrb[0].mxu0 %v73
    %v198 = vpop.f32.mrb[0].mxu0
    %v199 = vadd.f32 %v54, %v198
    %v200 = vpop.f32.mrb[0].mxu0
    %201 = vmatprep.mubr.f32.mxu0 0.0
    %202 = vmatmul.mubr.f32.gmra.mrb[0].mxu0 %v76
    %v203 = vpop.f32.mrb[0].mxu0
    %v204 = vadd.f32 %v59, %v203
    %v205 = vpop.f32.mrb[0].mxu0
    %206 = vmatprep.mubr.f32.mxu0 0.0
    %207 = vmatmul.mubr.f32.gmra.mrb[0].mxu0 %v79
    %v208 = vpop.f32.mrb[0].mxu0
    %v209 = vadd.f32 %v64, %v208
    %v210 = vpop.f32.mrb[0].mxu0
    %211 = vmatprep.mubr.f32.mxu0 0.0
    %212 = vmatmul.mubr.f32.gmra.mrb[0].mxu0 %v82
    %v213 = vpop.f32.mrb[0].mxu0
    %v214 = vadd.f32 %v69, %v213
    %v215 = vpop.f32.mrb[0].mxu0
    %216 = vdwg.mxu0
    %v217 = vmax.f32 %v199, 0.0
    %v218 = vmax.f32 %v204, 0.0
    %v219 = vmax.f32 %v209, 0.0
    %v220 = vmax.f32 %v214, 0.0
    %v221 = vld [vmem:[%s3] sm:$0xff]
    %v222 = vld [vmem:[%s3 + $0x8] sm:$0xff]
    %v223 = vld [vmem:[%s3 + $0x10] sm:$0xff]
    %v224 = vld [vmem:[%s3 + $0x18] sm:$0xff]
    %v225 = vld [vmem:[%s4] sm:$0xff]
    %v226 = vld [vmem:[%s4 + $0x8] sm:$0xff]
    %v227 = vld [vmem:[%s4 + $0x10] sm:$0xff]
    %v228 = vld [vmem:[%s4 + $0x18] sm:$0xff]
    %230 = vset.pattern.permute.xlu0 0
    %231 = vperm.xlu0 %230, %v225
    %v232 = vpop.permute.xlu0 %231
    %235 = vset.pattern.permute.xlu0 0
    %236 = vperm.xlu0 %235, %v226
    %v237 = vpop.permute.xlu0 %236
    %240 = vset.pattern.permute.xlu0 0
    %241 = vperm.xlu0 %240, %v227
    %v242 = vpop.permute.xlu0 %241
    %245 = vset.pattern.permute.xlu0 0
    %246 = vperm.xlu0 %245, %v228
    %v247 = vpop.permute.xlu0 %246
    %vm249 = vcmask 261120
    %v251 = vsel %vm249, %v221, 0
    %v254 = vsel %vm249, %v222, 0
    %v257 = vsel %vm249, %v223, 0
    %v260 = vsel %vm249, %v224, 0
    %262 = vmatprep.subr.mxu0 0.0
    %263 = vmatpush1.msra.mxu0 %v217
    %264 = vmatprep.subr.mxu0 0.0
    %265 = vmatpush1.msra.mxu0 %v218
    %266 = vmatprep.subr.mxu0 0.0
    %267 = vmatpush1.msra.mxu0 %v219
    %268 = vmatprep.subr.mxu0 0.0
    %269 = vmatpush1.msra.mxu0 %v220
    %270 = vmatprep.subr.mxu0 0.0
    %271 = vmatpush1.msra.mxu0 0.0
    %272 = vmatprep.subr.mxu0 0.0
    %273 = vmatpush1.msra.mxu0 0.0
    %274 = vmatprep.subr.mxu0 0.0
    %275 = vmatpush1.msra.mxu0 0.0
    %276 = vmatprep.subr.mxu0 0.0
    %277 = vmatpush1.msra.mxu0 0.0
    %278 = vmatprep.subr.mxu0 0.0
    %279 = vmatpush1.msra.mxu0 0.0
    %280 = vmatprep.subr.mxu0 0.0
    %281 = vmatpush1.msra.mxu0 0.0
    %282 = vmatprep.subr.mxu0 0.0
    %283 = vmatpush1.msra.mxu0 0.0
    %284 = vmatprep.subr.mxu0 0.0
    %285 = vmatpush1.msra.mxu0 0.0
    %286 = vmatprep.subr.mxu0 0.0
    %287 = vmatpush1.msra.mxu0 0.0
    %288 = vmatprep.subr.mxu0 0.0
    %289 = vmatpush1.msra.mxu0 0.0
    %290 = vmatprep.subr.mxu0 0.0
    %291 = vmatpush1.msra.mxu0 0.0
    %292 = vmatprep.subr.mxu0 0.0
    %293 = vmatpush1.msra.mxu0 0.0
    %294 = vmatprep.subr.mxu0 0.0
    %295 = vmatpush1.msra.mxu0 0.0
    %296 = vmatprep.subr.mxu0 0.0
    %297 = vmatpush1.msra.mxu0 0.0
    %298 = vmatprep.subr.mxu0 0.0
    %299 = vmatpush1.msra.mxu0 0.0
    %300 = vmatprep.subr.mxu0 0.0
    %301 = vmatpush1.msra.mxu0 0.0
    %302 = vmatprep.subr.mxu0 0.0
    %303 = vmatpush1.msra.mxu0 0.0
    %304 = vmatprep.subr.mxu0 0.0
    %305 = vmatpush1.msra.mxu0 0.0
    %306 = vmatprep.subr.mxu0 0.0
    %307 = vmatpush1.msra.mxu0 0.0
    %308 = vmatprep.subr.mxu0 0.0
    %309 = vmatpush1.msra.mxu0 0.0
    %310 = vmatprep.subr.mxu0 0.0
    %311 = vmatpush1.msra.mxu0 0.0
    %312 = vmatprep.subr.mxu0 0.0
    %313 = vmatpush1.msra.mxu0 0.0
    %314 = vmatprep.subr.mxu0 0.0
    %315 = vmatpush1.msra.mxu0 0.0
    %316 = vmatprep.subr.mxu0 0.0
    %317 = vmatpush1.msra.mxu0 0.0
    %318 = vmatprep.subr.mxu0 0.0
    %319 = vmatpush1.msra.mxu0 0.0
    %320 = vmatprep.subr.mxu0 0.0
    %321 = vmatpush1.msra.mxu0 0.0
    %322 = vmatprep.subr.mxu0 0.0
    %323 = vmatpush1.msra.mxu0 0.0
    %324 = vmatprep.subr.mxu0 0.0
    %325 = vmatpush1.msra.mxu0 0.0
    %326 = vmatprep.mubr.f32.mxu0 0.0
    %327 = vmatmul.mubr.f32.gmra.mrb[0].mxu0 %v251
    %v328 = vpop.f32.mrb[0].mxu0
    %v329 = vadd.f32 %v232, %v328
    %v330 = vpop.f32.mrb[0].mxu0
    %331 = vmatprep.mubr.f32.mxu0 0.0
    %332 = vmatmul.mubr.f32.gmra.mrb[0].mxu0 %v254
    %v333 = vpop.f32.mrb[0].mxu0
    %v334 = vadd.f32 %v237, %v333
    %v335 = vpop.f32.mrb[0].mxu0
    %336 = vmatprep.mubr.f32.mxu0 0.0
    %337 = vmatmul.mubr.f32.gmra.mrb[0].mxu0 %v257
    %v338 = vpop.f32.mrb[0].mxu0
    %v339 = vadd.f32 %v242, %v338
    %v340 = vpop.f32.mrb[0].mxu0
    %341 = vmatprep.mubr.f32.mxu0 0.0
    %342 = vmatmul.mubr.f32.gmra.mrb[0].mxu0 %v260
    %v343 = vpop.f32.mrb[0].mxu0
    %v344 = vadd.f32 %v247, %v343
    %v345 = vpop.f32.mrb[0].mxu0
    %346 = vdwg.mxu0
    %v347 = vmax.f32 %v329, 0.0
    %v348 = vmax.f32 %v334, 0.0
    %v349 = vmax.f32 %v339, 0.0
    %v350 = vmax.f32 %v344, 0.0
    %v351 = vld [vmem:[%s5] sm:$0xf]
    %v352 = vld [vmem:[%s6] sm:$0xf]
    %354 = vset.pattern.permute.xlu0 0
    %355 = vperm.xlu0 %354, %v352
    %v356 = vpop.permute.xlu0 %355
    %v359 = vsel %vm249, %v351, 0
    %361 = vmatprep.subr.mxu0 0.0
    %362 = vmatpush1.msra.mxu0 %v347
    %363 = vmatprep.subr.mxu0 0.0
    %364 = vmatpush1.msra.mxu0 %v348
    %365 = vmatprep.subr.mxu0 0.0
    %366 = vmatpush1.msra.mxu0 %v349
    %367 = vmatprep.subr.mxu0 0.0
    %368 = vmatpush1.msra.mxu0 %v350
    %369 = vmatprep.subr.mxu0 0.0
    %370 = vmatpush1.msra.mxu0 0.0
    %371 = vmatprep.subr.mxu0 0.0
    %372 = vmatpush1.msra.mxu0 0.0
    %373 = vmatprep.subr.mxu0 0.0
    %374 = vmatpush1.msra.mxu0 0.0
    %375 = vmatprep.subr.mxu0 0.0
    %376 = vmatpush1.msra.mxu0 0.0
    %377 = vmatprep.subr.mxu0 0.0
    %378 = vmatpush1.msra.mxu0 0.0
    %379 = vmatprep.subr.mxu0 0.0
    %380 = vmatpush1.msra.mxu0 0.0
    %381 = vmatprep.subr.mxu0 0.0
    %382 = vmatpush1.msra.mxu0 0.0
    %383 = vmatprep.subr.mxu0 0.0
    %384 = vmatpush1.msra.mxu0 0.0
    %385 = vmatprep.subr.mxu0 0.0
    %386 = vmatpush1.msra.mxu0 0.0
    %387 = vmatprep.subr.mxu0 0.0
    %388 = vmatpush1.msra.mxu0 0.0
    %389 = vmatprep.subr.mxu0 0.0
    %390 = vmatpush1.msra.mxu0 0.0
    %391 = vmatprep.subr.mxu0 0.0
    %392 = vmatpush1.msra.mxu0 0.0
    %393 = vmatprep.subr.mxu0 0.0
    %394 = vmatpush1.msra.mxu0 0.0
    %395 = vmatprep.subr.mxu0 0.0
    %396 = vmatpush1.msra.mxu0 0.0
    %397 = vmatprep.subr.mxu0 0.0
    %398 = vmatpush1.msra.mxu0 0.0
    %399 = vmatprep.subr.mxu0 0.0
    %400 = vmatpush1.msra.mxu0 0.0
    %401 = vmatprep.subr.mxu0 0.0
    %402 = vmatpush1.msra.mxu0 0.0
    %403 = vmatprep.subr.mxu0 0.0
    %404 = vmatpush1.msra.mxu0 0.0
    %405 = vmatprep.subr.mxu0 0.0
    %406 = vmatpush1.msra.mxu0 0.0
    %407 = vmatprep.subr.mxu0 0.0
    %408 = vmatpush1.msra.mxu0 0.0
    %409 = vmatprep.subr.mxu0 0.0
    %410 = vmatpush1.msra.mxu0 0.0
    %411 = vmatprep.subr.mxu0 0.0
    %412 = vmatpush1.msra.mxu0 0.0
    %413 = vmatprep.subr.mxu0 0.0
    %414 = vmatpush1.msra.mxu0 0.0
    %415 = vmatprep.subr.mxu0 0.0
    %416 = vmatpush1.msra.mxu0 0.0
    %417 = vmatprep.subr.mxu0 0.0
    %418 = vmatpush1.msra.mxu0 0.0
    %419 = vmatprep.subr.mxu0 0.0
    %420 = vmatpush1.msra.mxu0 0.0
    %421 = vmatprep.subr.mxu0 0.0
    %422 = vmatpush1.msra.mxu0 0.0
    %423 = vmatprep.subr.mxu0 0.0
    %424 = vmatpush1.msra.mxu0 0.0
    %425 = vmatprep.mubr.f32.mxu0 0.0
    %426 = vmatmul.mubr.f32.gmra.mrb[0].mxu0 %v359
    %v427 = vpop.f32.mrb[0].mxu0
    %v428 = vadd.f32 %v356, %v427
    %v429 = vpop.f32.mrb[0].mxu0
    %430 = vdwg.mxu0
    %v431 = vtanh.pop %v428
    %432 = vst [vmem:[#allocation2] sm:$0xf] %v431
    // Predicated region
    $region30: #{smart_particle_controller.1} parent=1 // pred_check
      _
    $region31: #{smart_particle_controller.1} parent=1 // pred_check_branch
      %434 = sbr.rel (0) target = $region33
    $region32: #{smart_particle_controller.1} parent=1 // pred_region
      %s436 = ssub.s32 64, 64
      %437 = vsyncadd [#allocation3], %s436
      %s439 = sshll.u32 [#allocation2], 4
      %s440 = int_to_ptr.vmem [resolvable:$true] %s439
      %442 = dma.vmem_to_hbm [thread:$0]  %s440, 64, %s7, [#allocation3]
    $region33: #{smart_particle_controller.1} parent=1 // pred_fallthru
      _
    // Predicated region
    $region34: #{smart_particle_controller.1} parent=1 // pred_check
      _
    $region35: #{smart_particle_controller.1} parent=1 // pred_check_branch
      %444 = sbr.rel (0) target = $region37
    $region36: #{smart_particle_controller.1} parent=1 // pred_region
      %445 = dma.done [#allocation3], 64
    $region37: #{smart_particle_controller.1} parent=1 // pred_fallthru
      _
    %446 = vsyncpa [#allocation3], 1

</llo_original>
